<compile_context>
chip_gen: v5e
topology: v5e:2x2
jax: 0.10.0
libtpu: 0.0.40
codegen_flags: <defaults>
</compile_context>

<pallas_src>
import jax
import jax.numpy as jnp
from jax.experimental import pallas as pl
from jax.experimental.pallas import tpu as pltpu

LANE = 128          # TPU lane width — output is padded to a multiple of this
MAX_TILE_B = 512    # batch tile cap (v7x-safe VMEM budget for these widths)


def dueling_kernel(x_ref, w1_ref, b1_ref, w2_ref, b2_ref, w3_ref, b3_ref, q_ref):
    """Three fused matmuls; dueling combine is pre-folded into w3/b3."""
    x = x_ref[...]

    # feature layer: Linear + ReLU
    feat = jnp.dot(x, w1_ref[...], preferred_element_type=jnp.float32) + b1_ref[...]
    feat = jnp.maximum(feat, 0.0)

    # fused advantage|value hidden layer: Linear + ReLU  ->  [B, 2H]
    h = jnp.dot(feat, w2_ref[...], preferred_element_type=jnp.float32) + b2_ref[...]
    h = jnp.maximum(h, 0.0)

    # fused output layer (mean-subtraction + value broadcast folded in),
    # padded to a lane-dense [B, out_pad] slab.
    q = jnp.dot(h, w3_ref[...], preferred_element_type=jnp.float32) + b3_ref[...]
    q_ref[...] = q.astype(q_ref.dtype)


def pack_params(params, out_dim):
    """Wrapper-side weight fusion + lane padding (pure JAX, done once)."""
    (w1, b1, w2a, b2a, w3a, b3a, w2v, b2v, w3v, b3v) = params

    # Fused hidden branch weights: [H, 2H], [1, 2H]
    w2 = jnp.concatenate([w2a, w2v], axis=1)
    b2 = jnp.concatenate([b2a, b2v], axis=1)

    # Fold "subtract mean over advantage" into the advantage output weights:
    #   adv - mean(adv) == adv @ C,  C = I - (1/out_dim) * ones
    c = jnp.eye(out_dim, dtype=jnp.float32) - jnp.full(
        (out_dim, out_dim), 1.0 / out_dim, dtype=jnp.float32)
    w3a_c = w3a @ c                                   # [H, out_dim]
    b3a_c = b3a @ c                                   # [1, out_dim]

    # Fold the value broadcast (value is added to every q column):
    ones_row = jnp.ones((1, out_dim), dtype=jnp.float32)
    w3v_b = w3v @ ones_row                            # [H, out_dim]
    b3v_b = b3v @ ones_row                            # [1, out_dim]

    # Single fused output layer over h = [adv_h | val_h]:
    w3 = jnp.concatenate([w3a_c, w3v_b], axis=0)      # [2H, out_dim]
    b3 = b3a_c + b3v_b                                # [1, out_dim]

    # Pad output lanes to a multiple of 128 for unmasked (lane-dense) stores.
    out_pad = LANE * pl.cdiv(out_dim, LANE)
    pad = out_pad - out_dim
    w3 = jnp.pad(w3, ((0, 0), (0, pad)))
    b3 = jnp.pad(b3, ((0, 0), (0, pad)))

    return (w1, b1, w2, b2, w3, b3)


def dueling_forward(x, packed, out_dim):
    """Batch-tiled Pallas call; weights resident in VMEM across the grid."""
    w1, b1, w2, b2, w3, b3 = packed
    B, in_dim = x.shape
    out_pad = w3.shape[1]

    # Full batch per block when small; otherwise 512-row tiles (multiple of 8).
    tile_b = B if B <= MAX_TILE_B else MAX_TILE_B
    grid = (pl.cdiv(B, tile_b),)

    grid_spec = pltpu.PrefetchScalarGridSpec(
        num_scalar_prefetch=0,
        grid=grid,
        in_specs=[
            pl.BlockSpec((tile_b, in_dim), lambda i: (i, 0)),   # x: tiled on batch
            pl.BlockSpec(w1.shape, lambda i: (0, 0)),           # weights resident
            pl.BlockSpec(b1.shape, lambda i: (0, 0)),
            pl.BlockSpec(w2.shape, lambda i: (0, 0)),
            pl.BlockSpec(b2.shape, lambda i: (0, 0)),
            pl.BlockSpec(w3.shape, lambda i: (0, 0)),
            pl.BlockSpec(b3.shape, lambda i: (0, 0)),
        ],
        out_specs=pl.BlockSpec((tile_b, out_pad), lambda i: (i, 0)),
    )

    q_pad = pl.pallas_call(
        dueling_kernel,
        out_shape=jax.ShapeDtypeStruct((B, out_pad), jnp.float32),
        grid_spec=grid_spec,
        compiler_params=pltpu.CompilerParams(
            dimension_semantics=("parallel",)),
    )(x, w1, b1, w2, b2, w3, b3)

    # Drop padded lanes.
    return q_pad[:, :out_dim]


def init_params(key, in_dim, out_dim, hidden_size):
    """Deterministic synthetic parameter init (shapes match the nn.Module)."""
    keys = jax.random.split(key, 10)
    scale = 0.1

    def lin(kw, kb, fan_in, fan_out):
        w = scale * jax.random.normal(kw, (fan_in, fan_out), jnp.float32)
        b = scale * jax.random.normal(kb, (1, fan_out), jnp.float32)
        return w, b

    w1, b1 = lin(keys[0], keys[1], in_dim, hidden_size)           # feature_layer
    w2a, b2a = lin(keys[2], keys[3], hidden_size, hidden_size)    # advantage_layer[0]
    w3a, b3a = lin(keys[4], keys[5], hidden_size, out_dim)        # advantage_layer[2]
    w2v, b2v = lin(keys[6], keys[7], hidden_size, hidden_size)    # value_layer[0]
    w3v, b3v = lin(keys[8], keys[9], hidden_size, 1)              # value_layer[2]
    return (w1, b1, w2a, b2a, w3a, b3a, w2v, b2v, w3v, b3v)


def reference_forward(x, params):
    """Pure-JAX reference on the ORIGINAL (unfused) params."""
    (w1, b1, w2a, b2a, w3a, b3a, w2v, b2v, w3v, b3v) = params
    feat = jax.nn.relu(x @ w1 + b1)
    adv = jax.nn.relu(feat @ w2a + b2a) @ w3a + b3a
    val = jax.nn.relu(feat @ w2v + b2v) @ w3v + b3v
    return val + adv - adv.mean(axis=-1, keepdims=True)


if __name__ == "__main__":
    key = jax.random.PRNGKey(0)
    k_x, k_p = jax.random.split(key)

    B, in_dim, out_dim, hidden = 8, 16, 4, 32
    x = jax.random.normal(k_x, (B, in_dim), jnp.float32)
    params = init_params(k_p, in_dim, out_dim, hidden)

    packed = pack_params(params, out_dim)
    q = dueling_forward(x, packed, out_dim)
    q = jax.block_until_ready(q)

    q_ref = reference_forward(x, params)
    assert q.shape == (B, out_dim)
    assert jnp.allclose(q, q_ref, atol=1e-5, rtol=1e-5), "mismatch vs reference"

    print("KERNEL_OK")
</pallas_src>

<mosaic_0001>
module attributes {stable_mosaic.version = 11 : i64} {
  func.func @dueling_kernel(%arg0: i32, %arg1: memref<8x16xf32, #tpu.memory_space<vmem>>, %arg2: memref<16x32xf32, #tpu.memory_space<vmem>>, %arg3: memref<1x32xf32, #tpu.memory_space<vmem>>, %arg4: memref<32x64xf32, #tpu.memory_space<vmem>>, %arg5: memref<1x64xf32, #tpu.memory_space<vmem>>, %arg6: memref<64x128xf32, #tpu.memory_space<vmem>>, %arg7: memref<1x128xf32, #tpu.memory_space<vmem>>, %arg8: memref<8x128xf32, #tpu.memory_space<vmem>>) attributes {dimension_semantics = [#tpu.dimension_semantics<parallel>], iteration_bounds = array<i64: 1>, scalar_prefetch = 0 : i64, scratch_operands = 0 : i64, tpu.core_type = #tpu.core_type<tc>, window_params = [{transform_indices = @transform_0, window_bounds = array<i64: 8, 16>}, {pipeline_mode = #tpu.pipeline_mode<synchronous>, transform_indices = @transform_1, window_bounds = array<i64: 16, 32>}, {pipeline_mode = #tpu.pipeline_mode<synchronous>, transform_indices = @transform_2, window_bounds = array<i64: 1, 32>}, {pipeline_mode = #tpu.pipeline_mode<synchronous>, transform_indices = @transform_3, window_bounds = array<i64: 32, 64>}, {pipeline_mode = #tpu.pipeline_mode<synchronous>, transform_indices = @transform_4, window_bounds = array<i64: 1, 64>}, {pipeline_mode = #tpu.pipeline_mode<synchronous>, transform_indices = @transform_5, window_bounds = array<i64: 64, 128>}, {pipeline_mode = #tpu.pipeline_mode<synchronous>, transform_indices = @transform_6, window_bounds = array<i64: 1, 128>}, {transform_indices = @transform_7, window_bounds = array<i64: 8, 128>}]} {
    %c0 = arith.constant 0 : index
    %c0_0 = arith.constant 0 : index
    %0 = vector.load %arg1[%c0, %c0_0] : memref<8x16xf32, #tpu.memory_space<vmem>>, vector<8x16xf32>
    %c0_1 = arith.constant 0 : index
    %c0_2 = arith.constant 0 : index
    %1 = vector.load %arg2[%c0_1, %c0_2] : memref<16x32xf32, #tpu.memory_space<vmem>>, vector<16x32xf32>
    %cst = arith.constant dense<0.000000e+00> : vector<8x32xf32>
    %2 = tpu.matmul %0, %1, %cst {dimension_numbers = #tpu.dot_dimension_numbers<[1], [0], [0], [1], [0, 0, 1, 1], [], []>} : vector<8x16xf32>, vector<16x32xf32>, vector<8x32xf32> -> vector<8x32xf32>
    %c0_3 = arith.constant 0 : index
    %c0_4 = arith.constant 0 : index
    %3 = vector.load %arg3[%c0_3, %c0_4] : memref<1x32xf32, #tpu.memory_space<vmem>>, vector<1x32xf32>
    %4 = vector.broadcast %3 : vector<1x32xf32> to vector<8x32xf32>
    %5 = arith.addf %2, %4 : vector<8x32xf32>
    %cst_5 = arith.constant 0.000000e+00 : f32
    %6 = vector.broadcast %cst_5 : f32 to vector<8x32xf32>
    %7 = arith.maximumf %5, %6 : vector<8x32xf32>
    %c0_6 = arith.constant 0 : index
    %c0_7 = arith.constant 0 : index
    %8 = vector.load %arg4[%c0_6, %c0_7] : memref<32x64xf32, #tpu.memory_space<vmem>>, vector<32x64xf32>
    %cst_8 = arith.constant dense<0.000000e+00> : vector<8x64xf32>
    %9 = tpu.matmul %7, %8, %cst_8 {dimension_numbers = #tpu.dot_dimension_numbers<[1], [0], [0], [1], [0, 0, 1, 1], [], []>} : vector<8x32xf32>, vector<32x64xf32>, vector<8x64xf32> -> vector<8x64xf32>
    %c0_9 = arith.constant 0 : index
    %c0_10 = arith.constant 0 : index
    %10 = vector.load %arg5[%c0_9, %c0_10] : memref<1x64xf32, #tpu.memory_space<vmem>>, vector<1x64xf32>
    %11 = vector.broadcast %10 : vector<1x64xf32> to vector<8x64xf32>
    %12 = arith.addf %9, %11 : vector<8x64xf32>
    %cst_11 = arith.constant 0.000000e+00 : f32
    %13 = vector.broadcast %cst_11 : f32 to vector<8x64xf32>
    %14 = arith.maximumf %12, %13 : vector<8x64xf32>
    %c0_12 = arith.constant 0 : index
    %c0_13 = arith.constant 0 : index
    %15 = vector.load %arg6[%c0_12, %c0_13] : memref<64x128xf32, #tpu.memory_space<vmem>>, vector<64x128xf32>
    %cst_14 = arith.constant dense<0.000000e+00> : vector<8x128xf32>
    %16 = tpu.matmul %14, %15, %cst_14 {dimension_numbers = #tpu.dot_dimension_numbers<[1], [0], [0], [1], [0, 0, 1, 1], [], []>} : vector<8x64xf32>, vector<64x128xf32>, vector<8x128xf32> -> vector<8x128xf32>
    %c0_15 = arith.constant 0 : index
    %c0_16 = arith.constant 0 : index
    %17 = vector.load %arg7[%c0_15, %c0_16] : memref<1x128xf32, #tpu.memory_space<vmem>>, vector<1x128xf32>
    %18 = vector.broadcast %17 : vector<1x128xf32> to vector<8x128xf32>
    %19 = arith.addf %16, %18 : vector<8x128xf32>
    %c0_17 = arith.constant 0 : index
    %c0_18 = arith.constant 0 : index
    %20 = vector.load %arg8[%c0_17, %c0_18] : memref<8x128xf32, #tpu.memory_space<vmem>>, vector<8x128xf32>
    tpu.vector_store %arg8[%c0_17, %c0_18], %19 {strides = array<i32>} : memref<8x128xf32, #tpu.memory_space<vmem>>, vector<8x128xf32>,
    return
  }
  func.func @transform_0(%arg0: i32) -> (i32, i32) {
    %c0_i32 = arith.constant 0 : i32
    %c0_i32_0 = arith.constant 0 : i32
    return %arg0, %c0_i32 : i32, i32
  }
  func.func @transform_1(%arg0: i32) -> (i32, i32) {
    %c0_i32 = arith.constant 0 : i32
    %c0_i32_0 = arith.constant 0 : i32
    %c0_i32_1 = arith.constant 0 : i32
    return %c0_i32, %c0_i32_0 : i32, i32
  }
  func.func @transform_2(%arg0: i32) -> (i32, i32) {
    %c0_i32 = arith.constant 0 : i32
    %c0_i32_0 = arith.constant 0 : i32
    %c0_i32_1 = arith.constant 0 : i32
    return %c0_i32, %c0_i32_0 : i32, i32
  }
  func.func @transform_3(%arg0: i32) -> (i32, i32) {
    %c0_i32 = arith.constant 0 : i32
    %c0_i32_0 = arith.constant 0 : i32
    %c0_i32_1 = arith.constant 0 : i32
    return %c0_i32, %c0_i32_0 : i32, i32
  }
  func.func @transform_4(%arg0: i32) -> (i32, i32) {
    %c0_i32 = arith.constant 0 : i32
    %c0_i32_0 = arith.constant 0 : i32
    %c0_i32_1 = arith.constant 0 : i32
    return %c0_i32, %c0_i32_0 : i32, i32
  }
  func.func @transform_5(%arg0: i32) -> (i32, i32) {
    %c0_i32 = arith.constant 0 : i32
    %c0_i32_0 = arith.constant 0 : i32
    %c0_i32_1 = arith.constant 0 : i32
    return %c0_i32, %c0_i32_0 : i32, i32
  }
  func.func @transform_6(%arg0: i32) -> (i32, i32) {
    %c0_i32 = arith.constant 0 : i32
    %c0_i32_0 = arith.constant 0 : i32
    %c0_i32_1 = arith.constant 0 : i32
    return %c0_i32, %c0_i32_0 : i32, i32
  }
  func.func @transform_7(%arg0: i32) -> (i32, i32) {
    %c0_i32 = arith.constant 0 : i32
    %c0_i32_0 = arith.constant 0 : i32
    return %arg0, %c0_i32 : i32, i32
  }
}

</mosaic_0001>

<llo_original>
// kernel: tpu_custom_call.1
$region0: #{tpu_custom_call.1}
  #allocation0 [shape = 'u32[]', space=smem, size = 0x4, offset = 0x4, fixed_abs, tag = 'smem constant byte address 0x4 - core index']
  #allocation1 [shape = 'u32[72,128]{1,0:T(1,128)}', space=vmem, size = 0x9000, scoped, tag = 'internal scratch']
  %s0 = inlined_call_operand.hbm [shape: f32[8,16], index: 0, kind: input, shape index: {}]
  %s1 = inlined_call_operand.hbm [shape: f32[16,32], index: 1, kind: input, shape index: {}]
  %s2 = inlined_call_operand.vmem [shape: f32[1,32], index: 2, kind: input, shape index: {}]
  %s3 = inlined_call_operand.hbm [shape: f32[32,64], index: 3, kind: input, shape index: {}]
  %s4 = inlined_call_operand.vmem [shape: f32[1,64], index: 4, kind: input, shape index: {}]
  %s5 = inlined_call_operand.hbm [shape: f32[64,128], index: 5, kind: input, shape index: {}]
  %s6 = inlined_call_operand.vmem [shape: f32[1,128], index: 6, kind: input, shape index: {}]
  %s7 = inlined_call_operand.hbm [shape: f32[8,128], index: 7, kind: output, shape index: {}]
  %s8 = sld [smem:[#allocation0]]
  $region54: #{tpu_custom_call.1} parent=0
    _
  %s10 = ssub.s32 1, %s8
  %s11 = scalar_select 0, %s10, %s8
  $region1: #{tpu_custom_call.1} parent=0
    #allocation2 [shape = 'u8[4096]{0}', space=vmem, size = 0x1000, scoped, tag = 'input window, operand 0, single buffered']
    #allocation3 [shape = 's32[1]{0}', space=sflag, size = 0x4, scoped, tag = 'scoped memory for tpu_custom_call.1']
    #allocation4 [shape = 's32[1]{0}', space=sflag, size = 0x4, scoped, tag = 'scoped memory for tpu_custom_call.1']
    #allocation5 [shape = 'u8[8192]{0}', space=vmem, size = 0x2000, scoped, tag = 'input window, operand 1, single buffered']
    #allocation6 [shape = 's32[1]{0}', space=sflag, size = 0x4, scoped, tag = 'scoped memory for tpu_custom_call.1']
    #allocation7 [shape = 'u8[16384]{0}', space=vmem, size = 0x4000, scoped, tag = 'input window, operand 3, single buffered']
    #allocation8 [shape = 'u8[32768]{0}', space=vmem, size = 0x8000, scoped, tag = 'input window, operand 5, single buffered']
    #allocation9 [shape = 's32[1]{0}', space=sflag, size = 0x4, scoped, tag = 'scoped memory for tpu_custom_call.1']
    #allocation10 [shape = 'u8[4096]{0}', space=vmem, size = 0x1000, scoped, tag = 'output window, operand 0, single buffered']
    %12 = vsyncpa [#allocation3], 0
    %13 = vsyncpa [#allocation6], 0
    %14 = vsyncpa [#allocation9], 0
    %15 = vsyncpa [#allocation4], 0
    // Predicated region
    $region2: #{tpu_custom_call.1} parent=1 // pred_check
      _
    $region3: #{tpu_custom_call.1} parent=1 // pred_check_branch
      %17 = sbr.rel (0) target = $region5
    $region4: #{tpu_custom_call.1} parent=1 // pred_region
      %19 = vsyncadd [#allocation3], 0
      %s21 = sshll.u32 %s0, 4
      %s22 = int_to_ptr.hbm [resolvable:$true] %s21
      %s23 = sshll.u32 [#allocation2], 4
      %s24 = int_to_ptr.vmem [resolvable:$true] %s23
      %26 = dma.hbm_to_vmem [thread:$0]  %s22, 128, %s24, [#allocation3]
    $region5: #{tpu_custom_call.1} parent=1 // pred_fallthru
      _
    // Predicated region
    $region6: #{tpu_custom_call.1} parent=1 // pred_check
      _
    $region7: #{tpu_custom_call.1} parent=1 // pred_check_branch
      %28 = sbr.rel (0) target = $region9
    $region8: #{tpu_custom_call.1} parent=1 // pred_region
      %30 = vsyncadd [#allocation6], 0
      %s31 = sshll.u32 %s1, 4
      %s32 = int_to_ptr.hbm [resolvable:$true] %s31
      %s33 = sshll.u32 [#allocation5], 4
      %s34 = int_to_ptr.vmem [resolvable:$true] %s33
      %39 = dma.hbm_to_vmem [thread:$0]  %s32, 256, %s34, [#allocation6], 128, 128, 8
    $region9: #{tpu_custom_call.1} parent=1 // pred_fallthru
      _
    // Predicated region
    $region10: #{tpu_custom_call.1} parent=1 // pred_check
      _
    $region11: #{tpu_custom_call.1} parent=1 // pred_check_branch
      %41 = sbr.rel (0) target = $region13
    $region12: #{tpu_custom_call.1} parent=1 // pred_region
      _
    $region13: #{tpu_custom_call.1} parent=1 // pred_fallthru
      _
    // Predicated region
    $region14: #{tpu_custom_call.1} parent=1 // pred_check
      _
    $region15: #{tpu_custom_call.1} parent=1 // pred_check_branch
      %43 = sbr.rel (0) target = $region17
    $region16: #{tpu_custom_call.1} parent=1 // pred_region
      %45 = vsyncadd [#allocation6], 0
      %s46 = sshll.u32 %s3, 4
      %s47 = int_to_ptr.hbm [resolvable:$true] %s46
      %s48 = sshll.u32 [#allocation7], 4
      %s49 = int_to_ptr.vmem [resolvable:$true] %s48
      %54 = dma.hbm_to_vmem [thread:$0]  %s47, 512, %s49, [#allocation6], 128, 128, 8
    $region17: #{tpu_custom_call.1} parent=1 // pred_fallthru
      _
    // Predicated region
    $region18: #{tpu_custom_call.1} parent=1 // pred_check
      _
    $region19: #{tpu_custom_call.1} parent=1 // pred_check_branch
      %56 = sbr.rel (0) target = $region21
    $region20: #{tpu_custom_call.1} parent=1 // pred_region
      _
    $region21: #{tpu_custom_call.1} parent=1 // pred_fallthru
      _
    // Predicated region
    $region22: #{tpu_custom_call.1} parent=1 // pred_check
      _
    $region23: #{tpu_custom_call.1} parent=1 // pred_check_branch
      %58 = sbr.rel (0) target = $region25
    $region24: #{tpu_custom_call.1} parent=1 // pred_region
      %60 = vsyncadd [#allocation9], 0
      %s61 = sshll.u32 %s5, 4
      %s62 = int_to_ptr.hbm [resolvable:$true] %s61
      %s63 = sshll.u32 [#allocation8], 4
      %s64 = int_to_ptr.vmem [resolvable:$true] %s63
      %69 = dma.hbm_to_vmem [thread:$0]  %s62, 1024, %s64, [#allocation9], 128, 128, 8
    $region25: #{tpu_custom_call.1} parent=1 // pred_fallthru
      _
    // Predicated region
    $region26: #{tpu_custom_call.1} parent=1 // pred_check
      _
    $region27: #{tpu_custom_call.1} parent=1 // pred_check_branch
      %71 = sbr.rel (0) target = $region29
    $region28: #{tpu_custom_call.1} parent=1 // pred_region
      _
    $region29: #{tpu_custom_call.1} parent=1 // pred_fallthru
      _
    // Predicated region
    $region30: #{tpu_custom_call.1} parent=1 // pred_check
      _
    $region31: #{tpu_custom_call.1} parent=1 // pred_check_branch
      %73 = sbr.rel (0) target = $region33
    $region32: #{tpu_custom_call.1} parent=1 // pred_region
      %75 = dma.done [#allocation3], 128
    $region33: #{tpu_custom_call.1} parent=1 // pred_fallthru
      _
    // Predicated region
    $region34: #{tpu_custom_call.1} parent=1 // pred_check
      _
    $region35: #{tpu_custom_call.1} parent=1 // pred_check_branch
      %77 = sbr.rel (0) target = $region37
    $region36: #{tpu_custom_call.1} parent=1 // pred_region
      %79 = dma.done [#allocation6], 256
    $region37: #{tpu_custom_call.1} parent=1 // pred_fallthru
      _
    // Predicated region
    $region38: #{tpu_custom_call.1} parent=1 // pred_check
      _
    $region39: #{tpu_custom_call.1} parent=1 // pred_check_branch
      %81 = sbr.rel (0) target = $region41
    $region40: #{tpu_custom_call.1} parent=1 // pred_region
      %83 = dma.done [#allocation6], 512
    $region41: #{tpu_custom_call.1} parent=1 // pred_fallthru
      _
    // Predicated region
    $region42: #{tpu_custom_call.1} parent=1 // pred_check
      _
    $region43: #{tpu_custom_call.1} parent=1 // pred_check_branch
      %85 = sbr.rel (0) target = $region45
    $region44: #{tpu_custom_call.1} parent=1 // pred_region
      %87 = dma.done [#allocation9], 1024
    $region45: #{tpu_custom_call.1} parent=1 // pred_fallthru
      _
    %v88 = vld [vmem:[#allocation2] sm:$0xff]
    %v89 = vld [vmem:[#allocation5] sm:$0xff]
    %v90 = vld [vmem:[#allocation5 + $0x8] sm:$0xff]
    %v91 = vld [vmem:[%s2] sm:$0x1]
    %v93 = vperm.slane %v91, 0
    %vm95 = vcmask 130048
    %v97 = vsel %vm95, %v88, 0
    %99 = vmatpush.msra.mxu0 0.0
    %100 = vmatpush.msra.mxu0 0.0
    %101 = vmatpush.msra.mxu0 0.0
    %102 = vmatpush.msra.mxu0 0.0
    %103 = vmatpush.msra.mxu0 0.0
    %104 = vmatpush.msra.mxu0 0.0
    %105 = vmatpush.msra.mxu0 0.0
    %106 = vmatpush.msra.mxu0 0.0
    %107 = vmatpush.msra.mxu0 0.0
    %108 = vmatpush.msra.mxu0 0.0
    %109 = vmatpush.msra.mxu0 0.0
    %110 = vmatpush.msra.mxu0 0.0
    %111 = vmatpush.msra.mxu0 0.0
    %112 = vmatpush.msra.mxu0 0.0
    %113 = vmatpush.msra.mxu0 %v90
    %114 = vmatpush.msra.mxu0 %v89
    %115 = vmatmul.f32.gmra.mxu0 %v97
    %v116 = vpop.f32.mrf.mxu0
    %v117 = vadd.f32 %v93, %v116
    %118 = vdwg.mxu0
    %v119 = vmax.f32 %v117, 0.0
    %v120 = vld [vmem:[#allocation7] sm:$0xff]
    %v121 = vld [vmem:[#allocation7 + $0x8] sm:$0xff]
    %v122 = vld [vmem:[#allocation7 + $0x10] sm:$0xff]
    %v123 = vld [vmem:[#allocation7 + $0x18] sm:$0xff]
    %v124 = vld [vmem:[%s4] sm:$0x1]
    %v126 = vperm.slane %v124, 0
    %vm128 = vcmask 261120
    %v130 = vsel %vm128, %v119, 0
    %132 = vmatpush.msra.mxu0 0.0
    %133 = vmatpush.msra.mxu0 0.0
    %134 = vmatpush.msra.mxu0 0.0
    %135 = vmatpush.msra.mxu0 0.0
    %136 = vmatpush.msra.mxu0 0.0
    %137 = vmatpush.msra.mxu0 0.0
    %138 = vmatpush.msra.mxu0 0.0
    %139 = vmatpush.msra.mxu0 0.0
    %140 = vmatpush.msra.mxu0 0.0
    %141 = vmatpush.msra.mxu0 0.0
    %142 = vmatpush.msra.mxu0 0.0
    %143 = vmatpush.msra.mxu0 0.0
    %144 = vmatpush.msra.mxu0 %v123
    %145 = vmatpush.msra.mxu0 %v122
    %146 = vmatpush.msra.mxu0 %v121
    %147 = vmatpush.msra.mxu0 %v120
    %148 = vmatmul.f32.gmra.mxu0 %v130
    %v149 = vpop.f32.mrf.mxu0
    %v150 = vadd.f32 %v126, %v149
    %151 = vdwg.mxu0
    %v152 = vmax.f32 %v150, 0.0
    %v153 = vld [vmem:[#allocation8] sm:$0xff]
    %v154 = vld [vmem:[#allocation8 + $0x8] sm:$0xff]
    %v155 = vld [vmem:[#allocation8 + $0x10] sm:$0xff]
    %v156 = vld [vmem:[#allocation8 + $0x18] sm:$0xff]
    %v157 = vld [vmem:[#allocation8 + $0x20] sm:$0xff]
    %v158 = vld [vmem:[#allocation8 + $0x28] sm:$0xff]
    %v159 = vld [vmem:[#allocation8 + $0x30] sm:$0xff]
    %v160 = vld [vmem:[#allocation8 + $0x38] sm:$0xff]
    %v161 = vld [vmem:[%s6] sm:$0x1]
    %v163 = vperm.slane %v161, 0
    %vm165 = vcmask 523264
    %v167 = vsel %vm165, %v152, 0
    %169 = vmatpush.msra.mxu0 0.0
    %170 = vmatpush.msra.mxu0 0.0
    %171 = vmatpush.msra.mxu0 0.0
    %172 = vmatpush.msra.mxu0 0.0
    %173 = vmatpush.msra.mxu0 0.0
    %174 = vmatpush.msra.mxu0 0.0
    %175 = vmatpush.msra.mxu0 0.0
    %176 = vmatpush.msra.mxu0 0.0
    %177 = vmatpush.msra.mxu0 %v160
    %178 = vmatpush.msra.mxu0 %v159
    %179 = vmatpush.msra.mxu0 %v158
    %180 = vmatpush.msra.mxu0 %v157
    %181 = vmatpush.msra.mxu0 %v156
    %182 = vmatpush.msra.mxu0 %v155
    %183 = vmatpush.msra.mxu0 %v154
    %184 = vmatpush.msra.mxu0 %v153
    %185 = vmatmul.f32.gmra.mxu0 %v167
    %v186 = vpop.f32.mrf.mxu0
    %v187 = vadd.f32 %v163, %v186
    %188 = vdwg.mxu0
    %189 = vst [vmem:[#allocation10] sm:$0xff] %v187
    // Predicated region
    $region46: #{tpu_custom_call.1} parent=1 // pred_check
      _
    $region47: #{tpu_custom_call.1} parent=1 // pred_check_branch
      %191 = sbr.rel (0) target = $region49
    $region48: #{tpu_custom_call.1} parent=1 // pred_region
      %193 = vsyncadd [#allocation4], 0
      %s195 = sshll.u32 [#allocation10], 4
      %s196 = int_to_ptr.vmem [resolvable:$true] %s195
      %s197 = sshll.u32 %s7, 4
      %s198 = int_to_ptr.hbm [resolvable:$true] %s197
      %200 = dma.vmem_to_hbm [thread:$0]  %s196, 128, %s198, [#allocation4]
    $region49: #{tpu_custom_call.1} parent=1 // pred_fallthru
      _
    // Predicated region
    $region50: #{tpu_custom_call.1} parent=1 // pred_check
      _
    $region51: #{tpu_custom_call.1} parent=1 // pred_check_branch
      %202 = sbr.rel (0) target = $region53
    $region52: #{tpu_custom_call.1} parent=1 // pred_region
      %204 = dma.done [#allocation4], 128
    $region53: #{tpu_custom_call.1} parent=1 // pred_fallthru
      _
    %205 = vsyncpa [#allocation3], 1
    %206 = vsyncpa [#allocation6], 1
    %207 = vsyncpa [#allocation9], 1
    %208 = vsyncpa [#allocation4], 1

</llo_original>
